<compile_context>
chip_gen: v7x
topology: tpu7x:2x2x1
jax: 0.10.0
libtpu: 0.0.40
codegen_flags: <defaults>
</compile_context>

<pallas_src>
import functools

import numpy as np
import jax
import jax.numpy as jnp
from jax import lax
from jax.experimental import pallas as pl
from jax.experimental.pallas import tpu as pltpu


_TARGET_X_BLOCK_BYTES = 3 * 1024 * 1024


def _pixel_tile(hw, channels, itemsize):
    """Largest pixel tile: multiple of 128, exact divisor of hw, within budget."""
    if hw % 128 != 0 or channels * hw * itemsize <= _TARGET_X_BLOCK_BYTES:
        return hw                       # full trailing dim is always legal
    t = max(128, (_TARGET_X_BLOCK_BYTES // (channels * itemsize)) // 128 * 128)
    while hw % t != 0:                  # exact divisor: spatial var-sum must see no pad
        t -= 128
    return t


def _fused_mc_kernel(num_samples, threshold, scale,
                     seed_ref, w_ref, b_ref, x_ref,
                     mean_ref, unc_ref, sum_ref, sumsq_ref):
    """One (batch n, pixel-tile t, sample s) grid step.

    x_ref    : (1, C, T)   input tile (DMA'd once per (n, t), reused over s)
    w_ref    : (C, C)      1x1-conv weight (resident)
    b_ref    : (C, 1)      bias (resident)
    mean_ref : (1, C, T)   mean prediction, written at s == S-1
    unc_ref  : (1, 1, C, 1) per-tile spatial sum of unbiased sample variance
    sum_ref / sumsq_ref : (C, T) f32 running sums across samples.
    """
    n = pl.program_id(0)
    t = pl.program_id(1)
    s = pl.program_id(2)
    _, C, T = x_ref.shape

    @pl.when(s == 0)
    def _init():
        sum_ref[...] = jnp.zeros_like(sum_ref)
        sumsq_ref[...] = jnp.zeros_like(sumsq_ref)

    # ---- dropout mask: counter hash keyed by (seed, sample, batch, tile) ----
    # Scalar key is built on the scalar unit (free); vreg work is counter ^ key
    # plus a uint32 xorshift-multiply mixer (logical shifts, no mask ANDs).
    gold = jnp.int32(-1640531527)                        # 0x9E3779B9
    key = seed_ref[0]
    key = key * gold + (s + jnp.int32(1))
    key = key * gold + n
    key = key * gold + t

    c_iota = lax.broadcasted_iota(jnp.int32, (C, T), 0)
    p_iota = lax.broadcasted_iota(jnp.int32, (C, T), 1)
    counter = (c_iota << 20) | p_iota                    # unique within tile (T < 2^20)
    v = pltpu.bitcast(counter ^ key, jnp.uint32)
    v = v ^ (v >> jnp.uint32(16))
    v = v * jnp.uint32(0x7FEB352D)
    v = v ^ (v >> jnp.uint32(15))
    v = v * jnp.uint32(0x846CA68B)                       # (drop this round / use HW PRNG
    v = v ^ (v >> jnp.uint32(16))                        #  if v7x ever becomes VALU-bound)
    keep = (v >> jnp.uint32(8)) < jnp.uint32(threshold)  # keep prob = 1 - p

    x = x_ref[0].astype(jnp.float32)                     # (C, T)
    xd = jnp.where(keep, x * jnp.float32(scale), jnp.float32(0.0))

    # ---- 1x1 conv as unrolled VPU outer-product FMAs (no MXU for small C) ---
    w = w_ref[...].astype(jnp.float32)                   # (Cout, Cin)
    y = w[:, 0:1] * xd[0:1, :]
    for c in range(1, C):
        y = y + w[:, c:c + 1] * xd[c:c + 1, :]
    y = y + b_ref[...].astype(jnp.float32)               # (C,T) + (C,1) broadcast

    # ---- Monte-Carlo statistics in f32 scratch ------------------------------
    sum_ref[...] += y
    sumsq_ref[...] += y * y

    @pl.when(s == num_samples - 1)
    def _finalize():
        mean = sum_ref[...] * jnp.float32(1.0 / num_samples)
        mean_ref[0] = mean.astype(mean_ref.dtype)
        var_num = sumsq_ref[...] - jnp.float32(num_samples) * mean * mean
        var = jnp.maximum(var_num, 0.0) * jnp.float32(1.0 / max(num_samples - 1, 1))
        unc_ref[0, 0, :, :] = jnp.sum(var, axis=1, keepdims=True)   # (C, 1)


@functools.partial(jax.jit, static_argnames=("p", "num_samples"))
def uncertainty_estimator_forward(x, conv_w, conv_b, *, p=0.5, num_samples=10,
                                  base_seed=0):
    """UncertaintyEstimator.forward: returns (mean_prediction, uncertainty)."""
    N, C, H, W = x.shape
    hw = H * W
    x3 = x.reshape(N, C, hw)
    b2 = conv_b.reshape(C, 1)
    T = _pixel_tile(hw, C, x.dtype.itemsize)
    num_tiles = hw // T

    p = float(p)
    # Keep iff hash24 < round((1-p) * 2^24); p == 0 keeps everything exactly.
    threshold = min(int(round((1.0 - p) * float(1 << 24))), 1 << 24)
    scale = 0.0 if p >= 1.0 else 1.0 / (1.0 - p)
    seed_arr = jnp.full((1,), base_seed, dtype=jnp.int32)

    kernel = functools.partial(_fused_mc_kernel, num_samples, threshold, scale)

    mean3, unc_part = pl.pallas_call(
        kernel,
        out_shape=(
            jax.ShapeDtypeStruct((N, C, hw), x.dtype),
            jax.ShapeDtypeStruct((N, num_tiles, C, 1), jnp.float32),
        ),
        grid=(N, num_tiles, num_samples),
        in_specs=[
            pl.BlockSpec(memory_space=pltpu.MemorySpace.SMEM),        # seed (1,)
            pl.BlockSpec((C, C), lambda n, t, s: (0, 0)),             # conv weight
            pl.BlockSpec((C, 1), lambda n, t, s: (0, 0)),             # conv bias
            pl.BlockSpec((1, C, T), lambda n, t, s: (n, 0, t)),       # x tile (reused over s)
        ],
        out_specs=(
            pl.BlockSpec((1, C, T), lambda n, t, s: (n, 0, t)),       # mean prediction
            pl.BlockSpec((1, 1, C, 1), lambda n, t, s: (n, t, 0, 0)), # per-tile var sums
        ),
        scratch_shapes=[
            pltpu.VMEM((C, T), jnp.float32),     # sum_s y
            pltpu.VMEM((C, T), jnp.float32),     # sum_s y^2
        ],
        compiler_params=pltpu.CompilerParams(
            dimension_semantics=("parallel", "parallel", "arbitrary"),
            vmem_limit_bytes=32 * 1024 * 1024,
        ),
    )(seed_arr, conv_w, b2, x3)

    mean_prediction = mean3.reshape(N, C, H, W)
    uncertainty = (jnp.sum(unc_part, axis=1) / float(hw)).reshape(N, C, 1, 1)
    return mean_prediction, uncertainty


if __name__ == "__main__":
    key = jax.random.PRNGKey(0)
    k_x, k_w, k_b = jax.random.split(key, 3)

    # Small NCHW feature map + 1x1 conv parameters, consistent with the module.
    N, C, H, W = 2, 4, 16, 16
    x = jax.random.normal(k_x, (N, C, H, W), dtype=jnp.float32)
    conv_w = 0.1 * jax.random.normal(k_w, (C, C), dtype=jnp.float32)
    conv_b = 0.1 * jax.random.normal(k_b, (C,), dtype=jnp.float32)

    # --- p = 0 edge case: dropout is the identity, every sample is identical,
    # so the fused kernel must reproduce the plain 1x1 conv exactly and report
    # (numerically) zero uncertainty. Exercises the conv + accumulation path.
    mean0, unc0 = uncertainty_estimator_forward(x, conv_w, conv_b, p=0.0,
                                                num_samples=3, base_seed=7)
    mean0 = jax.block_until_ready(mean0)
    unc0 = jax.block_until_ready(unc0)
    ref = (x[:, None, :, :, :] * conv_w[None, :, :, None, None]).sum(axis=2) \
        + conv_b[None, :, None, None]
    np.testing.assert_allclose(np.asarray(mean0), np.asarray(ref),
                               rtol=1e-5, atol=1e-5)
    np.testing.assert_allclose(np.asarray(unc0), 0.0, atol=1e-4)

    # --- p = 0.5 Monte-Carlo run (the module's actual configuration) ---------
    mean_pred, uncertainty = uncertainty_estimator_forward(
        x, conv_w, conv_b, p=0.5, num_samples=10, base_seed=42)
    mean_pred = jax.block_until_ready(mean_pred)
    uncertainty = jax.block_until_ready(uncertainty)
    assert mean_pred.shape == (N, C, H, W)
    assert uncertainty.shape == (N, C, 1, 1)
    assert bool(jnp.all(jnp.isfinite(mean_pred)))
    assert bool(jnp.all(uncertainty > 0.0))

    # Deterministic for a fixed seed, fresh masks for a different seed.
    mean_pred_b, _ = uncertainty_estimator_forward(
        x, conv_w, conv_b, p=0.5, num_samples=10, base_seed=42)
    np.testing.assert_array_equal(np.asarray(mean_pred), np.asarray(mean_pred_b))
    mean_pred_c, _ = uncertainty_estimator_forward(
        x, conv_w, conv_b, p=0.5, num_samples=10, base_seed=43)
    assert not np.array_equal(np.asarray(mean_pred), np.asarray(mean_pred_c))

    print("KERNEL_OK")
</pallas_src>

<mosaic_0001>
module attributes {stable_mosaic.version = 11 : i64} {
  func.func @_fused_mc_kernel(%arg0: i32, %arg1: i32, %arg2: i32, %arg3: memref<1xi32, #tpu.memory_space<smem>>, %arg4: memref<4x4xf32, #tpu.memory_space<vmem>>, %arg5: memref<4x1xf32, #tpu.memory_space<vmem>>, %arg6: memref<1x4x256xf32, #tpu.memory_space<vmem>>, %arg7: memref<1x4x256xf32, #tpu.memory_space<vmem>>, %arg8: memref<1x1x4x1xf32, #tpu.memory_space<vmem>>, %arg9: memref<4x256xf32, #tpu.memory_space<vmem>>, %arg10: memref<4x256xf32, #tpu.memory_space<vmem>>) attributes {dimension_semantics = [#tpu.dimension_semantics<parallel>, #tpu.dimension_semantics<parallel>, #tpu.dimension_semantics<arbitrary>], iteration_bounds = array<i64: 2, 1, 3>, scalar_prefetch = 0 : i64, scratch_operands = 2 : i64, tpu.core_type = #tpu.core_type<tc>, window_params = [{transform_indices = @transform_0, window_bounds = array<i64: 1>}, {pipeline_mode = #tpu.pipeline_mode<synchronous>, transform_indices = @transform_1, window_bounds = array<i64: 4, 4>}, {pipeline_mode = #tpu.pipeline_mode<synchronous>, transform_indices = @transform_2, window_bounds = array<i64: 4, 1>}, {transform_indices = @transform_3, window_bounds = array<i64: 1, 4, 256>}, {transform_indices = @transform_4, window_bounds = array<i64: 1, 4, 256>}, {transform_indices = @transform_5, window_bounds = array<i64: 1, 1, 4, 1>}]} {
    %c0_i32 = arith.constant 0 : i32
    %0 = arith.cmpi eq, %arg2, %c0_i32 : i32
    %1 = arith.extui %0 : i1 to i32
    %c0_i32_0 = arith.constant 0 : i32
    %2 = arith.cmpi ne, %1, %c0_i32_0 : i32
    scf.if %2 {
      %cst_21 = arith.constant 0.000000e+00 : f32
      %79 = vector.broadcast %cst_21 : f32 to vector<4x256xf32>
      %c0_22 = arith.constant 0 : index
      %c0_23 = arith.constant 0 : index
      %80 = vector.load %arg9[%c0_22, %c0_23] : memref<4x256xf32, #tpu.memory_space<vmem>>, vector<4x256xf32>
      tpu.vector_store %arg9[%c0_22, %c0_23], %79 {strides = array<i32>} : memref<4x256xf32, #tpu.memory_space<vmem>>, vector<4x256xf32>,
      %cst_24 = arith.constant 0.000000e+00 : f32
      %81 = vector.broadcast %cst_24 : f32 to vector<4x256xf32>
      %c0_25 = arith.constant 0 : index
      %c0_26 = arith.constant 0 : index
      %82 = vector.load %arg10[%c0_25, %c0_26] : memref<4x256xf32, #tpu.memory_space<vmem>>, vector<4x256xf32>
      tpu.vector_store %arg10[%c0_25, %c0_26], %81 {strides = array<i32>} : memref<4x256xf32, #tpu.memory_space<vmem>>, vector<4x256xf32>,
    } else {
    }
    %c0 = arith.constant 0 : index
    %3 = memref.load %arg3[%c0] : memref<1xi32, #tpu.memory_space<smem>>
    %c-1640531527_i32 = arith.constant -1640531527 : i32
    %4 = arith.muli %3, %c-1640531527_i32 : i32
    %c1_i32 = arith.constant 1 : i32
    %5 = arith.addi %arg2, %c1_i32 : i32
    %6 = arith.addi %4, %5 : i32
    %c-1640531527_i32_1 = arith.constant -1640531527 : i32
    %7 = arith.muli %6, %c-1640531527_i32_1 : i32
    %8 = arith.addi %7, %arg0 : i32
    %c-1640531527_i32_2 = arith.constant -1640531527 : i32
    %9 = arith.muli %8, %c-1640531527_i32_2 : i32
    %10 = arith.addi %9, %arg1 : i32
    %11 = tpu.iota {dimensions = array<i32: 0>} : vector<4x256xi32>
    %12 = tpu.iota {dimensions = array<i32: 1>} : vector<4x256xi32>
    %c20_i32 = arith.constant 20 : i32
    %13 = vector.broadcast %c20_i32 : i32 to vector<4x256xi32>
    %14 = arith.shli %11, %13 : vector<4x256xi32>
    %15 = arith.ori %14, %12 : vector<4x256xi32>
    %16 = vector.broadcast %10 : i32 to vector<4x256xi32>
    %17 = arith.xori %15, %16 : vector<4x256xi32>
    %18 = tpu.bitcast %17 : vector<4x256xi32> -> vector<4x256xi32>
    %c16_i32 = arith.constant 16 : i32
    %19 = vector.broadcast %c16_i32 : i32 to vector<4x256xi32>
    %20 = arith.shrui %18, %19 : vector<4x256xi32>
    %21 = arith.xori %18, %20 : vector<4x256xi32>
    %c2146121005_i32 = arith.constant 2146121005 : i32
    %22 = vector.broadcast %c2146121005_i32 : i32 to vector<4x256xi32>
    %23 = arith.muli %21, %22 : vector<4x256xi32>
    %c15_i32 = arith.constant 15 : i32
    %24 = vector.broadcast %c15_i32 : i32 to vector<4x256xi32>
    %25 = arith.shrui %23, %24 : vector<4x256xi32>
    %26 = arith.xori %23, %25 : vector<4x256xi32>
    %c-2073254261_i32 = arith.constant -2073254261 : i32
    %27 = vector.broadcast %c-2073254261_i32 : i32 to vector<4x256xi32>
    %28 = arith.muli %26, %27 : vector<4x256xi32>
    %c16_i32_3 = arith.constant 16 : i32
    %29 = vector.broadcast %c16_i32_3 : i32 to vector<4x256xi32>
    %30 = arith.shrui %28, %29 : vector<4x256xi32>
    %31 = arith.xori %28, %30 : vector<4x256xi32>
    %c8_i32 = arith.constant 8 : i32
    %32 = vector.broadcast %c8_i32 : i32 to vector<4x256xi32>
    %33 = arith.shrui %31, %32 : vector<4x256xi32>
    %c16777216_i32 = arith.constant 16777216 : i32
    %34 = vector.broadcast %c16777216_i32 : i32 to vector<4x256xi32>
    %35 = arith.cmpi ult, %33, %34 : vector<4x256xi32>
    %c0_4 = arith.constant 0 : index
    %c0_5 = arith.constant 0 : index
    %c0_6 = arith.constant 0 : index
    %36 = vector.load %arg6[%c0_4, %c0_5, %c0_6] : memref<1x4x256xf32, #tpu.memory_space<vmem>>, vector<1x4x256xf32>
    %37 = vector.shape_cast %36 : vector<1x4x256xf32> to vector<4x256xf32>
    %cst = arith.constant 1.000000e+00 : f32
    %38 = vector.broadcast %cst : f32 to vector<4x256xf32>
    %39 = arith.mulf %37, %38 : vector<4x256xf32>
    %cst_7 = arith.constant 0.000000e+00 : f32
    %40 = vector.broadcast %cst_7 : f32 to vector<4x256xf32>
    %41 = arith.select %35, %39, %40 : vector<4x256xi1>, vector<4x256xf32>
    %c0_8 = arith.constant 0 : index
    %c0_9 = arith.constant 0 : index
    %42 = vector.load %arg4[%c0_8, %c0_9] : memref<4x4xf32, #tpu.memory_space<vmem>>, vector<4x4xf32>
    %43 = vector.extract_strided_slice %42 {offsets = [0, 0], sizes = [4, 1], strides = [1, 1]} : vector<4x4xf32> to vector<4x1xf32>
    %44 = vector.extract_strided_slice %41 {offsets = [0, 0], sizes = [1, 256], strides = [1, 1]} : vector<4x256xf32> to vector<1x256xf32>
    %45 = vector.broadcast %43 : vector<4x1xf32> to vector<4x256xf32>
    %46 = vector.broadcast %44 : vector<1x256xf32> to vector<4x256xf32>
    %47 = arith.mulf %45, %46 : vector<4x256xf32>
    %48 = vector.extract_strided_slice %42 {offsets = [0, 1], sizes = [4, 1], strides = [1, 1]} : vector<4x4xf32> to vector<4x1xf32>
    %49 = vector.extract_strided_slice %41 {offsets = [1, 0], sizes = [1, 256], strides = [1, 1]} : vector<4x256xf32> to vector<1x256xf32>
    %50 = vector.broadcast %48 : vector<4x1xf32> to vector<4x256xf32>
    %51 = vector.broadcast %49 : vector<1x256xf32> to vector<4x256xf32>
    %52 = arith.mulf %50, %51 : vector<4x256xf32>
    %53 = arith.addf %47, %52 : vector<4x256xf32>
    %54 = vector.extract_strided_slice %42 {offsets = [0, 2], sizes = [4, 1], strides = [1, 1]} : vector<4x4xf32> to vector<4x1xf32>
    %55 = vector.extract_strided_slice %41 {offsets = [2, 0], sizes = [1, 256], strides = [1, 1]} : vector<4x256xf32> to vector<1x256xf32>
    %56 = vector.broadcast %54 : vector<4x1xf32> to vector<4x256xf32>
    %57 = vector.broadcast %55 : vector<1x256xf32> to vector<4x256xf32>
    %58 = arith.mulf %56, %57 : vector<4x256xf32>
    %59 = arith.addf %53, %58 : vector<4x256xf32>
    %60 = vector.extract_strided_slice %42 {offsets = [0, 3], sizes = [4, 1], strides = [1, 1]} : vector<4x4xf32> to vector<4x1xf32>
    %61 = vector.extract_strided_slice %41 {offsets = [3, 0], sizes = [1, 256], strides = [1, 1]} : vector<4x256xf32> to vector<1x256xf32>
    %62 = vector.broadcast %60 : vector<4x1xf32> to vector<4x256xf32>
    %63 = vector.broadcast %61 : vector<1x256xf32> to vector<4x256xf32>
    %64 = arith.mulf %62, %63 : vector<4x256xf32>
    %65 = arith.addf %59, %64 : vector<4x256xf32>
    %c0_10 = arith.constant 0 : index
    %c0_11 = arith.constant 0 : index
    %66 = vector.load %arg5[%c0_10, %c0_11] : memref<4x1xf32, #tpu.memory_space<vmem>>, vector<4x1xf32>
    %67 = vector.broadcast %66 : vector<4x1xf32> to vector<4x256xf32>
    %68 = arith.addf %65, %67 : vector<4x256xf32>
    %c0_12 = arith.constant 0 : index
    %c0_13 = arith.constant 0 : index
    %69 = vector.load %arg9[%c0_12, %c0_13] : memref<4x256xf32, #tpu.memory_space<vmem>>, vector<4x256xf32>
    %70 = arith.addf %69, %68 : vector<4x256xf32>
    %c0_14 = arith.constant 0 : index
    %c0_15 = arith.constant 0 : index
    %71 = vector.load %arg9[%c0_14, %c0_15] : memref<4x256xf32, #tpu.memory_space<vmem>>, vector<4x256xf32>
    tpu.vector_store %arg9[%c0_14, %c0_15], %70 {strides = array<i32>} : memref<4x256xf32, #tpu.memory_space<vmem>>, vector<4x256xf32>,
    %c0_16 = arith.constant 0 : index
    %c0_17 = arith.constant 0 : index
    %72 = vector.load %arg10[%c0_16, %c0_17] : memref<4x256xf32, #tpu.memory_space<vmem>>, vector<4x256xf32>
    %73 = arith.mulf %68, %68 : vector<4x256xf32>
    %74 = arith.addf %72, %73 : vector<4x256xf32>
    %c0_18 = arith.constant 0 : index
    %c0_19 = arith.constant 0 : index
    %75 = vector.load %arg10[%c0_18, %c0_19] : memref<4x256xf32, #tpu.memory_space<vmem>>, vector<4x256xf32>
    tpu.vector_store %arg10[%c0_18, %c0_19], %74 {strides = array<i32>} : memref<4x256xf32, #tpu.memory_space<vmem>>, vector<4x256xf32>,
    %c2_i32 = arith.constant 2 : i32
    %76 = arith.cmpi eq, %arg2, %c2_i32 : i32
    %77 = arith.extui %76 : i1 to i32
    %c0_i32_20 = arith.constant 0 : i32
    %78 = arith.cmpi ne, %77, %c0_i32_20 : i32
    scf.if %78 {
      %c0_21 = arith.constant 0 : index
      %c0_22 = arith.constant 0 : index
      %79 = vector.load %arg9[%c0_21, %c0_22] : memref<4x256xf32, #tpu.memory_space<vmem>>, vector<4x256xf32>
      %cst_23 = arith.constant 0.333333343 : f32
      %80 = vector.broadcast %cst_23 : f32 to vector<4x256xf32>
      %81 = arith.mulf %79, %80 : vector<4x256xf32>
      %c0_24 = arith.constant 0 : index
      %c0_25 = arith.constant 0 : index
      %c0_26 = arith.constant 0 : index
      %82 = vector.load %arg7[%c0_24, %c0_25, %c0_26] : memref<1x4x256xf32, #tpu.memory_space<vmem>>, vector<1x4x256xf32>
      %83 = vector.shape_cast %82 : vector<1x4x256xf32> to vector<4x256xf32>
      %84 = vector.shape_cast %81 : vector<4x256xf32> to vector<1x4x256xf32>
      tpu.vector_store %arg7[%c0_24, %c0_25, %c0_26], %84 {strides = array<i32>} : memref<1x4x256xf32, #tpu.memory_space<vmem>>, vector<1x4x256xf32>,
      %c0_27 = arith.constant 0 : index
      %c0_28 = arith.constant 0 : index
      %85 = vector.load %arg10[%c0_27, %c0_28] : memref<4x256xf32, #tpu.memory_space<vmem>>, vector<4x256xf32>
      %cst_29 = arith.constant 3.000000e+00 : f32
      %86 = vector.broadcast %cst_29 : f32 to vector<4x256xf32>
      %87 = arith.mulf %86, %81 : vector<4x256xf32>
      %88 = arith.mulf %87, %81 : vector<4x256xf32>
      %89 = arith.subf %85, %88 : vector<4x256xf32>
      %cst_30 = arith.constant 0.000000e+00 : f32
      %90 = vector.broadcast %cst_30 : f32 to vector<4x256xf32>
      %91 = arith.maximumf %89, %90 : vector<4x256xf32>
      %cst_31 = arith.constant 5.000000e-01 : f32
      %92 = vector.broadcast %cst_31 : f32 to vector<4x256xf32>
      %93 = arith.mulf %91, %92 : vector<4x256xf32>
      %cst_32 = arith.constant dense<0.000000e+00> : vector<4xf32>
      %94 = vector.multi_reduction <add>, %93, %cst_32 [1] : vector<4x256xf32> to vector<4xf32>
      %95 = vector.shape_cast %94 : vector<4xf32> to vector<4x1xf32>
      %c0_33 = arith.constant 0 : index
      %c0_34 = arith.constant 0 : index
      %c0_35 = arith.constant 0 : index
      %c0_36 = arith.constant 0 : index
      %96 = vector.load %arg8[%c0_33, %c0_34, %c0_35, %c0_36] : memref<1x1x4x1xf32, #tpu.memory_space<vmem>>, vector<1x1x4x1xf32>
      %97 = vector.shape_cast %96 : vector<1x1x4x1xf32> to vector<4x1xf32>
      %98 = vector.shape_cast %95 : vector<4x1xf32> to vector<1x1x4x1xf32>
      tpu.vector_store %arg8[%c0_33, %c0_34, %c0_35, %c0_36], %98 {strides = array<i32>} : memref<1x1x4x1xf32, #tpu.memory_space<vmem>>, vector<1x1x4x1xf32>,
    } else {
    }
    return
  }
  func.func @transform_0(%arg0: i32, %arg1: i32, %arg2: i32) -> i32 {
    %c0_i32 = arith.constant 0 : i32
    %c0_i32_0 = arith.constant 0 : i32
    return %c0_i32 : i32
  }
  func.func @transform_1(%arg0: i32, %arg1: i32, %arg2: i32) -> (i32, i32) {
    %c0_i32 = arith.constant 0 : i32
    %c0_i32_0 = arith.constant 0 : i32
    %c0_i32_1 = arith.constant 0 : i32
    return %c0_i32, %c0_i32_0 : i32, i32
  }
  func.func @transform_2(%arg0: i32, %arg1: i32, %arg2: i32) -> (i32, i32) {
    %c0_i32 = arith.constant 0 : i32
    %c0_i32_0 = arith.constant 0 : i32
    %c0_i32_1 = arith.constant 0 : i32
    return %c0_i32, %c0_i32_0 : i32, i32
  }
  func.func @transform_3(%arg0: i32, %arg1: i32, %arg2: i32) -> (i32, i32, i32) {
    %c0_i32 = arith.constant 0 : i32
    %c0_i32_0 = arith.constant 0 : i32
    return %arg0, %c0_i32, %arg1 : i32, i32, i32
  }
  func.func @transform_4(%arg0: i32, %arg1: i32, %arg2: i32) -> (i32, i32, i32) {
    %c0_i32 = arith.constant 0 : i32
    %c0_i32_0 = arith.constant 0 : i32
    return %arg0, %c0_i32, %arg1 : i32, i32, i32
  }
  func.func @transform_5(%arg0: i32, %arg1: i32, %arg2: i32) -> (i32, i32, i32, i32) {
    %c0_i32 = arith.constant 0 : i32
    %c0_i32_0 = arith.constant 0 : i32
    %c0_i32_1 = arith.constant 0 : i32
    return %arg0, %arg1, %c0_i32, %c0_i32_0 : i32, i32, i32, i32
  }
}

</mosaic_0001>

<llo_original>
// kernel: uncertainty_estimator_forward.1
$region0: #{uncertainty_estimator_forward.1}
  #allocation0 [shape = 'u32[]', space=smem, size = 0x4, offset = 0x4, fixed_abs, tag = 'smem constant byte address 0x4 - core index']
  #allocation1 [shape = 'u32[144,128]{1,0:T(1,128)}', space=vmem, size = 0x12000, scoped, tag = 'internal scratch']
  #allocation2 [shape = 'f32[4,256]{1,0:T(4,128)}', space=vmem, size = 0x1000, scoped, tag = 'scratch operand']
  #allocation3 [shape = 'f32[4,256]{1,0:T(4,128)}', space=vmem, size = 0x1000, scoped, tag = 'scratch operand']
  #allocation4 [shape = 's32[1]{0:T(128)S(6)}', space=smem, size = 0x200, scoped, tag = 'scoped memory for uncertainty_estimator_forward.1']
  %s0 = inlined_call_operand.<no memory space> [shape: s32[1], index: 0, kind: input, shape index: {}]
  %s1 = inlined_call_operand.vmem [shape: f32[4,4], index: 1, kind: input, shape index: {}]
  %s2 = inlined_call_operand.vmem [shape: f32[4,1], index: 2, kind: input, shape index: {}]
  %s3 = inlined_call_operand.vmem [shape: f32[2,4,256], index: 3, kind: input, shape index: {}]
  %s4 = inlined_call_operand.vmem [shape: f32[2,4,256], index: 4, kind: output, shape index: {0}]
  %s5 = inlined_call_operand.vmem [shape: f32[2,1,4,1], index: 5, kind: output, shape index: {1}]
  %6 = xla_tuple %s4, %s5
  %s7 = sld [smem:[#allocation0]]
  $region65: #{uncertainty_estimator_forward.1} parent=0
    _
  %s9 = ssub.s32 1, %s7
  %s10 = scalar_select 0, %s9, %s7
  %11 = sst [smem:[#allocation4]] %s0
  loop: start=0, step=1, limit=8
  $region2: #{uncertainty_estimator_forward.1} parent=0 // loop_pre_header
    _
  $region3: #{uncertainty_estimator_forward.1} parent=0 // loop_header
    %s13 = sphi 0, %s17
    %p14 = scmp.ge.s32.totalorder %s13, 8
    %s20 = sphi 0, %s39
    %s21 = sphi 0, %s35
    %s22 = sphi 0, %s31
    %s23 = sphi 0, %s20
    %s24 = sphi 0, %s21
    %s25 = sphi 0, %s22
    %s26 = sphi 0, %s23
    %s27 = sphi 0, %s24
    %s28 = sphi 0, %s25
    %s40 = sphi 0, %s40
    %s42 = sphi 0, %s40
    %s43 = sphi 0, %s42
    %s57 = sphi 0, %s43
    %s61 = sphi 0, %s61
    %s63 = sphi 0, %s61
    %s64 = sphi 0, %s63
    %s78 = sphi 0, %s64
    %s82 = sphi 0, %s82
    %s84 = sphi 0, %s82
    %s85 = sphi 0, %s84
    %s99 = sphi 0, %s85
    %s107 = sphi 0, %s109
    %s110 = sphi 0, %s107
    %s111 = sphi 0, %s110
    %s127 = sphi 0, %s111
    %s135 = sphi 0, %s137
    %s138 = sphi 0, %s135
    %s139 = sphi 0, %s138
    %s155 = sphi 0, %s139
    %s163 = sphi 0, %s165
    %s166 = sphi 0, %s163
    %s167 = sphi 0, %s166
    %s183 = sphi 0, %s167
  $region4: #{uncertainty_estimator_forward.1} parent=0 // loop_header_branch
    %16 = sbr.rel (%p14) target = $region8
  $region5: #{uncertainty_estimator_forward.1} parent=0 // loop_body
    %s18 = ssub.s32 %s13, 1
    %s19 = ssub.s32 %s13, 2
    %s29 = sadd.s32 1, %s22
    %p30 = scmp.ge.s32.totalorder %s29, 3
    %s31 = scalar_select %p30, 0, %s29
    %s32 = sadd.s32 1, %s21
    %s33 = scalar_select %p30, %s32, %s21
    %p34 = scmp.ge.s32.totalorder %s33, 1
    %s35 = scalar_select %p34, 0, %s33
    %s36 = sadd.s32 1, %s20
    %s37 = scalar_select %p34, %s36, %s20
    %p38 = scmp.ge.s32.totalorder %s37, 2
    %s39 = scalar_select %p38, 0, %s37
    %s41 = sadd.s32 %s40, 1
    %p44 = scmp.eq.s32.totalorder %s13, 5
    %p45 = scmp.ne.s32.totalorder %s40, %s42
    %p46 = scmp.eq.s32.totalorder %s13, 0
    %p47 = por %p45, %p46
    %p48 = scmp.ne.s32.totalorder %s40, %s42
    %p49 = scmp.eq.s32.totalorder %s18, 5
    %p50 = por %p48, %p49
    %p51 = scmp.ne.s32.totalorder %s42, %s43
    %p52 = scmp.eq.s32.totalorder %s18, 0
    %p53 = por %p51, %p52
    %p54 = scmp.ne.s32.totalorder %s42, %s43
    %p55 = scmp.eq.s32.totalorder %s19, 5
    %p56 = por %p54, %p55
    %p58 = scmp.ne.s32.totalorder %s43, %s57
    %p59 = scmp.eq.s32.totalorder %s19, 0
    %p60 = por %p58, %p59
    %s62 = sadd.s32 %s61, 1
    %p65 = scmp.eq.s32.totalorder %s13, 5
    %p66 = scmp.ne.s32.totalorder %s61, %s63
    %p67 = scmp.eq.s32.totalorder %s13, 0
    %p68 = por %p66, %p67
    %p69 = scmp.ne.s32.totalorder %s61, %s63
    %p70 = scmp.eq.s32.totalorder %s18, 5
    %p71 = por %p69, %p70
    %p72 = scmp.ne.s32.totalorder %s63, %s64
    %p73 = scmp.eq.s32.totalorder %s18, 0
    %p74 = por %p72, %p73
    %p75 = scmp.ne.s32.totalorder %s63, %s64
    %p76 = scmp.eq.s32.totalorder %s19, 5
    %p77 = por %p75, %p76
    %p79 = scmp.ne.s32.totalorder %s64, %s78
    %p80 = scmp.eq.s32.totalorder %s19, 0
    %p81 = por %p79, %p80
    %s83 = sadd.s32 %s82, 1
    %p86 = scmp.eq.s32.totalorder %s13, 5
    %p87 = scmp.ne.s32.totalorder %s82, %s84
    %p88 = scmp.eq.s32.totalorder %s13, 0
    %p89 = por %p87, %p88
    %p90 = scmp.ne.s32.totalorder %s82, %s84
    %p91 = scmp.eq.s32.totalorder %s18, 5
    %p92 = por %p90, %p91
    %p93 = scmp.ne.s32.totalorder %s84, %s85
    %p94 = scmp.eq.s32.totalorder %s18, 0
    %p95 = por %p93, %p94
    %p96 = scmp.ne.s32.totalorder %s84, %s85
    %p97 = scmp.eq.s32.totalorder %s19, 5
    %p98 = por %p96, %p97
    %p100 = scmp.ne.s32.totalorder %s85, %s99
    %p101 = scmp.eq.s32.totalorder %s19, 0
    %p102 = por %p100, %p101
    %s103 = ssub.s32 %s20, %s39
    %s104 = ssub.s32 %s21, %s35
    %s105 = sor.u32 %s103, %s104
    %p106 = scmp.eq.s32.totalorder %s105, 0
    %s108 = sadd.s32 %s107, 1
    %s109 = scalar_select %p106, %s107, %s108
    %p112 = pneg %p106
    %p113 = scmp.eq.s32.totalorder %s13, 5
    %p114 = por %p112, %p113
    %p115 = scmp.ne.s32.totalorder %s107, %s110
    %p116 = scmp.eq.s32.totalorder %s13, 0
    %p117 = por %p115, %p116
    %p118 = scmp.ne.s32.totalorder %s107, %s110
    %p119 = scmp.eq.s32.totalorder %s18, 5
    %p120 = por %p118, %p119
    %p121 = scmp.ne.s32.totalorder %s110, %s111
    %p122 = scmp.eq.s32.totalorder %s18, 0
    %p123 = por %p121, %p122
    %p124 = scmp.ne.s32.totalorder %s110, %s111
    %p125 = scmp.eq.s32.totalorder %s19, 5
    %p126 = por %p124, %p125
    %p128 = scmp.ne.s32.totalorder %s111, %s127
    %p129 = scmp.eq.s32.totalorder %s19, 0
    %p130 = por %p128, %p129
    %s131 = ssub.s32 %s20, %s39
    %s132 = ssub.s32 %s21, %s35
    %s133 = sor.u32 %s131, %s132
    %p134 = scmp.eq.s32.totalorder %s133, 0
    %s136 = sadd.s32 %s135, 1
    %s137 = scalar_select %p134, %s135, %s136
    %p140 = pneg %p134
    %p141 = scmp.eq.s32.totalorder %s13, 5
    %p142 = por %p140, %p141
    %p143 = scmp.ne.s32.totalorder %s135, %s138
    %p144 = scmp.eq.s32.totalorder %s13, 0
    %p145 = por %p143, %p144
    %p146 = scmp.ne.s32.totalorder %s135, %s138
    %p147 = scmp.eq.s32.totalorder %s18, 5
    %p148 = por %p146, %p147
    %p149 = scmp.ne.s32.totalorder %s138, %s139
    %p150 = scmp.eq.s32.totalorder %s18, 0
    %p151 = por %p149, %p150
    %p152 = scmp.ne.s32.totalorder %s138, %s139
    %p153 = scmp.eq.s32.totalorder %s19, 5
    %p154 = por %p152, %p153
    %p156 = scmp.ne.s32.totalorder %s139, %s155
    %p157 = scmp.eq.s32.totalorder %s19, 0
    %p158 = por %p156, %p157
    %s159 = ssub.s32 %s20, %s39
    %s160 = ssub.s32 %s21, %s35
    %s161 = sor.u32 %s159, %s160
    %p162 = scmp.eq.s32.totalorder %s161, 0
    %s164 = sadd.s32 %s163, 1
    %s165 = scalar_select %p162, %s163, %s164
    %p168 = pneg %p162
    %p169 = scmp.eq.s32.totalorder %s13, 5
    %p170 = por %p168, %p169
    %p171 = scmp.ne.s32.totalorder %s163, %s166
    %p172 = scmp.eq.s32.totalorder %s13, 0
    %p173 = por %p171, %p172
    %p174 = scmp.ne.s32.totalorder %s163, %s166
    %p175 = scmp.eq.s32.totalorder %s18, 5
    %p176 = por %p174, %p175
    %p177 = scmp.ne.s32.totalorder %s166, %s167
    %p178 = scmp.eq.s32.totalorder %s18, 0
    %p179 = por %p177, %p178
    %p180 = scmp.ne.s32.totalorder %s166, %s167
    %p181 = scmp.eq.s32.totalorder %s19, 5
    %p182 = por %p180, %p181
    %p184 = scmp.ne.s32.totalorder %s167, %s183
    %p185 = scmp.eq.s32.totalorder %s19, 0
    %p186 = por %p184, %p185
    %p187 = scmp.le.s32.totalorder 1, %s13
    %p188 = scmp.lt.s32.totalorder %s13, 7
    %p189 = pnand %p187, %p188
    %p190 = pneg %p189
    // Predicated region
    $region9: #{uncertainty_estimator_forward.1} parent=5 // pred_check
      _
    $region10: #{uncertainty_estimator_forward.1} parent=5 // pred_check_branch
      %192 = sbr.rel (%p189) target = $region12
    $region11: #{uncertainty_estimator_forward.1} parent=5 // pred_region
      %s193 = ssub.s32 %s13, 1
      // Predicated region
      $region13: #{uncertainty_estimator_forward.1} parent=11 // pred_check
        %p194 = pneg %p53
      $region14: #{uncertainty_estimator_forward.1} parent=11 // pred_check_branch
        %196 = sbr.rel (%p194) target = $region16
      $region15: #{uncertainty_estimator_forward.1} parent=11 // pred_region
        _
      $region16: #{uncertainty_estimator_forward.1} parent=11 // pred_fallthru
        _
      // Predicated region
      $region17: #{uncertainty_estimator_forward.1} parent=11 // pred_check
        %p197 = pneg %p74
      $region18: #{uncertainty_estimator_forward.1} parent=11 // pred_check_branch
        %199 = sbr.rel (%p197) target = $region20
      $region19: #{uncertainty_estimator_forward.1} parent=11 // pred_region
        _
      $region20: #{uncertainty_estimator_forward.1} parent=11 // pred_fallthru
        _
      // Predicated region
      $region21: #{uncertainty_estimator_forward.1} parent=11 // pred_check
        %p200 = pneg %p95
      $region22: #{uncertainty_estimator_forward.1} parent=11 // pred_check_branch
        %202 = sbr.rel (%p200) target = $region24
      $region23: #{uncertainty_estimator_forward.1} parent=11 // pred_region
        _
      $region24: #{uncertainty_estimator_forward.1} parent=11 // pred_fallthru
        _
    $region12: #{uncertainty_estimator_forward.1} parent=5 // pred_fallthru
      _
    %p203 = scmp.lt.s32.totalorder %s13, 6
    // Predicated region
    $region25: #{uncertainty_estimator_forward.1} parent=5 // pred_check
      %p204 = pneg %p203
    $region26: #{uncertainty_estimator_forward.1} parent=5 // pred_check_branch
      %206 = sbr.rel (%p204) target = $region28
    $region27: #{uncertainty_estimator_forward.1} parent=5 // pred_region
      // Predicated region
      $region29: #{uncertainty_estimator_forward.1} parent=27 // pred_check
        %p207 = pneg %p117
      $region30: #{uncertainty_estimator_forward.1} parent=27 // pred_check_branch
        %209 = sbr.rel (%p207) target = $region32
      $region31: #{uncertainty_estimator_forward.1} parent=27 // pred_region
        %s210 = smul.u32 2, %s21
        %p211 = scmp.lt.s32.totalorder %s20, 1
        %s212 = scalar_select %p211, %s20, 1
        %p213 = scmp.lt.s32.totalorder %s210, 1
        %s214 = scalar_select %p213, %s210, 1
        %s215 = smul.addr %s212, 2
        %s216 = sadd.s32 %s214, %s215
        %s217 = smul.addr %s216, 4
        %s218 = scalar_lea.vmem %s3, %s217
        %s219 = smul.u32 2, %s21
      $region32: #{uncertainty_estimator_forward.1} parent=27 // pred_fallthru
        _
    $region28: #{uncertainty_estimator_forward.1} parent=5 // pred_fallthru
      _
    %p220 = scmp.le.s32.totalorder 1, %s13
    %p221 = scmp.lt.s32.totalorder %s13, 7
    %p222 = pnand %p220, %p221
    %p223 = pneg %p222
    // Predicated region
    $region33: #{uncertainty_estimator_forward.1} parent=5 // pred_check
      _
    $region34: #{uncertainty_estimator_forward.1} parent=5 // pred_check_branch
      %225 = sbr.rel (%p222) target = $region36
    $region35: #{uncertainty_estimator_forward.1} parent=5 // pred_region
      %s226 = ssub.s32 %s13, 1
      %p227 = pneg %p53
      %p228 = pneg %p50
      %p229 = pneg %p74
      %p230 = pneg %p71
      %p231 = pneg %p95
      %p232 = pneg %p92
      %s233 = smul.u32 2, %s24
      %p234 = scmp.lt.s32.totalorder %s23, 1
      %s235 = scalar_select %p234, %s23, 1
      %p236 = scmp.lt.s32.totalorder %s233, 1
      %s237 = scalar_select %p236, %s233, 1
      %s238 = smul.addr %s235, 2
      %s239 = sadd.s32 %s237, %s238
      %s240 = smul.addr %s239, 4
      %s241 = scalar_lea.vmem %s3, %s240
      %p242 = pneg %p123
      %p243 = pneg %p120
      %p244 = pneg %p151
      %p245 = pneg %p148
      %s246 = smul.u32 2, %s24
      %p247 = scmp.lt.s32.totalorder %s23, 1
      %s248 = scalar_select %p247, %s23, 1
      %p249 = scmp.lt.s32.totalorder %s246, 1
      %s250 = scalar_select %p249, %s246, 1
      %s251 = smul.addr %s248, 2
      %s252 = sadd.s32 %s250, %s251
      %s253 = smul.addr %s252, 4
      %s254 = scalar_lea.vmem %s4, %s253
      %p255 = pneg %p179
      %p256 = pneg %p176
      %p257 = scmp.lt.s32.totalorder %s23, 1
      %s258 = scalar_select %p257, %s23, 1
      %p259 = scmp.lt.s32.totalorder %s24, 0
      %s260 = scalar_select %p259, %s24, 0
      %s261 = sadd.s32 %s260, %s258
      %s262 = smul.addr %s261, 4
      %s263 = scalar_lea.vmem %s5, %s262
      %s264 = smul.u32 2, %s24
      %p265 = scmp.lt.s32.totalorder %s23, 1
      %s266 = scalar_select %p265, %s23, 1
      %p267 = scmp.lt.s32.totalorder %s264, 1
      %s268 = scalar_select %p267, %s264, 1
      %s269 = smul.addr %s266, 2
      %s270 = sadd.s32 %s268, %s269
      %s271 = smul.addr %s270, 4
      %s272 = scalar_lea.vmem %s3, %s271
      %s273 = smul.u32 2, %s24
      %s274 = smul.u32 2, %s24
      %p275 = scmp.lt.s32.totalorder %s23, 1
      %s276 = scalar_select %p275, %s23, 1
      %p277 = scmp.lt.s32.totalorder %s274, 1
      %s278 = scalar_select %p277, %s274, 1
      %s279 = smul.addr %s276, 2
      %s280 = sadd.s32 %s278, %s279
      %s281 = smul.addr %s280, 4
      %s282 = scalar_lea.vmem %s4, %s281
      %s283 = smul.u32 2, %s24
      %p284 = scmp.lt.s32.totalorder %s23, 1
      %s285 = scalar_select %p284, %s23, 1
      %p286 = scmp.lt.s32.totalorder %s24, 0
      %s287 = scalar_select %p286, %s24, 0
      %s288 = sadd.s32 %s287, %s285
      %s289 = smul.addr %s288, 4
      %s290 = scalar_lea.vmem %s5, %s289
      %p291 = scmp.eq.s32.totalorder %s25, 0
      // Predicated region
      $region37: #{uncertainty_estimator_forward.1} parent=35 // pred_check
        %p292 = pneg %p291
      $region38: #{uncertainty_estimator_forward.1} parent=35 // pred_check_branch
        %294 = sbr.rel (%p292) target = $region40
      $region39: #{uncertainty_estimator_forward.1} parent=35 // pred_region
        %295 = vst [vmem:[#allocation2] sm:$0xff] 0.0
        %296 = vst [vmem:[#allocation3] sm:$0xff] 0.0
      $region40: #{uncertainty_estimator_forward.1} parent=35 // pred_fallthru
        _
      %s297 = sld [smem:[#allocation4]]
      %s298 = smul.u32 %s297, 2654435769
      %s299 = sadd.s32 %s25, 1
      %s300 = sadd.s32 %s298, %s299
      %s301 = smul.u32 %s300, 2654435769
      %s302 = sadd.s32 %s301, %s23
      %s303 = smul.u32 %s302, 2654435769
      %s304 = sadd.s32 %s303, %s24
      %v305 = vlaneseq
      %v306 = vshrl.u32 %v305, 7
      %v307 = vlaneseq
      %v308 = vand.u32 %v307, 127
      %v309 = vadd.s32 %v308, 128
      %v310 = vshll.u32 %v306, 20
      %v311 = vor.u32 %v310, %v308
      %v312 = vor.u32 %v310, %v309
      %v313 = vstv %s304
      %v314 = vxor.u32 %v311, %v313
      %v315 = vxor.u32 %v312, %v313
      %v316 = vshrl.u32 %v314, 16
      %v317 = vshrl.u32 %v315, 16
      %v318 = vxor.u32 %v314, %v316
      %v319 = vxor.u32 %v315, %v317
      %v320 = vmul.u32 %v318, 2146121005
      %v321 = vmul.u32 %v319, 2146121005
      %v322 = vshrl.u32 %v320, 15
      %v323 = vshrl.u32 %v321, 15
      %v324 = vxor.u32 %v320, %v322
      %v325 = vxor.u32 %v321, %v323
      %v326 = vmul.u32 %v324, 2221713035
      %v327 = vmul.u32 %v325, 2221713035
      %v328 = vshrl.u32 %v326, 16
      %v329 = vshrl.u32 %v327, 16
      %v330 = vxor.u32 %v326, %v328
      %v331 = vxor.u32 %v327, %v329
      %v332 = vshrl.u32 %v330, 8
      %v333 = vshrl.u32 %v331, 8
      %vm334 = vcmp.lt.u32.totalorder %v332, 16777216
      %vm335 = vcmp.lt.u32.totalorder %v333, 16777216
      %v336 = vld [vmem:[%s272] sm:$0xff]
      %v338 = vcombine.high %v336, %v336
      %v340 = vsel %vm334, %v336, 0.0
      %v341 = vsel %vm335, %v338, 0.0
      %v342 = vld [vmem:[%s1] sm:$0xf]
      %344 = vset.pattern.permute.xlu0 0
      %345 = vperm.xlu0 %344, %v342
      %v346 = vpop.permute.xlu0 %345
      %v348 = vlaneseq
      %v349 = vshrl.u32 %v348, 7
      %v350 = vsub.s32 0, %v349
      %v351 = vrot.slane %v340, %v350
      %v352 = vlaneseq
      %v353 = vshrl.u32 %v352, 7
      %v354 = vsub.s32 0, %v353
      %v355 = vrot.slane %v341, %v354
      %v356 = vmul.f32 %v346, %v351
      %v357 = vmul.f32 %v346, %v355
      %358 = vset.pattern.permute.xlu0 1
      %359 = vperm.xlu0 %358, %v342
      %v360 = vpop.permute.xlu0 %359
      %v362 = vlaneseq
      %v363 = vshrl.u32 %v362, 7
      %v364 = vsub.s32 1, %v363
      %v365 = vrot.slane %v340, %v364
      %v366 = vlaneseq
      %v367 = vshrl.u32 %v366, 7
      %v368 = vsub.s32 1, %v367
      %v369 = vrot.slane %v341, %v368
      %v370 = vmul.f32 %v360, %v365
      %v371 = vmul.f32 %v360, %v369
      %v372 = vadd.f32 %v356, %v370
      %v373 = vadd.f32 %v357, %v371
      %374 = vset.pattern.permute.xlu0 2
      %375 = vperm.xlu0 %374, %v342
      %v376 = vpop.permute.xlu0 %375
      %v378 = vlaneseq
      %v379 = vshrl.u32 %v378, 7
      %v380 = vsub.s32 2, %v379
      %v381 = vrot.slane %v340, %v380
      %v382 = vlaneseq
      %v383 = vshrl.u32 %v382, 7
      %v384 = vsub.s32 2, %v383
      %v385 = vrot.slane %v341, %v384
      %v386 = vmul.f32 %v376, %v381
      %v387 = vmul.f32 %v376, %v385
      %v388 = vadd.f32 %v372, %v386
      %v389 = vadd.f32 %v373, %v387
      %390 = vset.pattern.permute.xlu0 3
      %391 = vperm.xlu0 %390, %v342
      %v392 = vpop.permute.xlu0 %391
      %v394 = vlaneseq
      %v395 = vshrl.u32 %v394, 7
      %v396 = vsub.s32 3, %v395
      %v397 = vrot.slane %v340, %v396
      %v398 = vlaneseq
      %v399 = vshrl.u32 %v398, 7
      %v400 = vsub.s32 3, %v399
      %v401 = vrot.slane %v341, %v400
      %v402 = vmul.f32 %v392, %v397
      %v403 = vmul.f32 %v392, %v401
      %v404 = vadd.f32 %v388, %v402
      %v405 = vadd.f32 %v389, %v403
      %v406 = vld [vmem:[%s2] sm:$0xf]
      %408 = vset.pattern.permute.xlu0 0
      %409 = vperm.xlu0 %408, %v406
      %v410 = vpop.permute.xlu0 %409
      %v412 = vadd.f32 %v404, %v410
      %v413 = vadd.f32 %v405, %v410
      %v414 = vld [vmem:[#allocation2] sm:$0xff]
      %v417 = vcombine.low %v412, %v413
      %v419 = vadd.f32 %v414, %v417
      %420 = vst [vmem:[#allocation2] sm:$0xff] %v419
      %v421 = vld [vmem:[#allocation3] sm:$0xff]
      %v422 = vmul.f32 %v412, %v412
      %v423 = vmul.f32 %v413, %v413
      %v426 = vcombine.low %v422, %v423
      %v428 = vadd.f32 %v421, %v426
      %429 = vst [vmem:[#allocation3] sm:$0xff] %v428
      %p430 = scmp.eq.s32.totalorder %s25, 2
      // Predicated region
      $region41: #{uncertainty_estimator_forward.1} parent=35 // pred_check
        %p431 = pneg %p430
      $region42: #{uncertainty_estimator_forward.1} parent=35 // pred_check_branch
        %433 = sbr.rel (%p431) target = $region44
      $region43: #{uncertainty_estimator_forward.1} parent=35 // pred_region
        %v434 = vld [vmem:[#allocation2] sm:$0xff]
        %v435 = vmul.f32 %v434, 0.33333334
        %436 = vst [vmem:[%s282] sm:$0xff] %v435
        %v437 = vld [vmem:[#allocation3] sm:$0xff]
        %v438 = vmul.f32 %v435, 3.0
        %v439 = vmul.f32 %v438, %v435
        %v440 = vsub.f32 %v437, %v439
        %v441 = vmax.f32 %v440, 0.0
        %v442 = vmul.f32 %v441, 0.5
        %v444 = vcombine.high %v442, %v442
        %vm446 = vcmask 1043456
        %v447 = vsel %vm446, %v442, 0.0
        %v448 = vsel %vm446, %v444, 0.0
        %v449 = vadd.f32 %v447, %v448
        %450 = vadd.xlane.f32.xlu0 %v449
        %v451 = vpop.xlane.xlu0 %450
        %vm452 = vcmask 3072
        %453 = vst.msk [vmem:[%s290] sm:$0xf] %vm452, %v451
      $region44: #{uncertainty_estimator_forward.1} parent=35 // pred_fallthru
        _
      %s454 = smul.u32 2, %s24
      %p455 = scmp.lt.s32.totalorder %s23, 1
      %s456 = scalar_select %p455, %s23, 1
      %p457 = scmp.lt.s32.totalorder %s454, 1
      %s458 = scalar_select %p457, %s454, 1
      %s459 = smul.addr %s456, 2
      %s460 = sadd.s32 %s458, %s459
      %s461 = smul.addr %s460, 4
      %s462 = scalar_lea.vmem %s4, %s461
      %p463 = scmp.lt.s32.totalorder %s23, 1
      %s464 = scalar_select %p463, %s23, 1
      %p465 = scmp.lt.s32.totalorder %s24, 0
      %s466 = scalar_select %p465, %s24, 0
      %s467 = sadd.s32 %s466, %s464
      %s468 = smul.addr %s467, 4
      %s469 = scalar_lea.vmem %s5, %s468
      // Predicated region
      $region45: #{uncertainty_estimator_forward.1} parent=35 // pred_check
        %p470 = pneg %p148
      $region46: #{uncertainty_estimator_forward.1} parent=35 // pred_check_branch
        %472 = sbr.rel (%p470) target = $region48
      $region47: #{uncertainty_estimator_forward.1} parent=35 // pred_region
        %s473 = smul.u32 2, %s24
      $region48: #{uncertainty_estimator_forward.1} parent=35 // pred_fallthru
        _
      // Predicated region
      $region49: #{uncertainty_estimator_forward.1} parent=35 // pred_check
        %p474 = pneg %p176
      $region50: #{uncertainty_estimator_forward.1} parent=35 // pred_check_branch
        %476 = sbr.rel (%p474) target = $region52
      $region51: #{uncertainty_estimator_forward.1} parent=35 // pred_region
        _
      $region52: #{uncertainty_estimator_forward.1} parent=35 // pred_fallthru
        _
    $region36: #{uncertainty_estimator_forward.1} parent=5 // pred_fallthru
      _
    %p477 = scmp.le.s32.totalorder 2, %s13
    // Predicated region
    $region53: #{uncertainty_estimator_forward.1} parent=5 // pred_check
      %p478 = pneg %p477
    $region54: #{uncertainty_estimator_forward.1} parent=5 // pred_check_branch
      %480 = sbr.rel (%p478) target = $region56
    $region55: #{uncertainty_estimator_forward.1} parent=5 // pred_region
      %s481 = ssub.s32 %s13, 2
      // Predicated region
      $region57: #{uncertainty_estimator_forward.1} parent=55 // pred_check
        %p482 = pneg %p154
      $region58: #{uncertainty_estimator_forward.1} parent=55 // pred_check_branch
        %484 = sbr.rel (%p482) target = $region60
      $region59: #{uncertainty_estimator_forward.1} parent=55 // pred_region
        %s485 = smul.u32 2, %s27
        %p486 = scmp.lt.s32.totalorder %s26, 1
        %s487 = scalar_select %p486, %s26, 1
        %p488 = scmp.lt.s32.totalorder %s485, 1
        %s489 = scalar_select %p488, %s485, 1
        %s490 = smul.addr %s487, 2
        %s491 = sadd.s32 %s489, %s490
        %s492 = smul.addr %s491, 4
        %s493 = scalar_lea.vmem %s4, %s492
      $region60: #{uncertainty_estimator_forward.1} parent=55 // pred_fallthru
        _
      // Predicated region
      $region61: #{uncertainty_estimator_forward.1} parent=55 // pred_check
        %p494 = pneg %p182
      $region62: #{uncertainty_estimator_forward.1} parent=55 // pred_check_branch
        %496 = sbr.rel (%p494) target = $region64
      $region63: #{uncertainty_estimator_forward.1} parent=55 // pred_region
        %p497 = scmp.lt.s32.totalorder %s26, 1
        %s498 = scalar_select %p497, %s26, 1
        %p499 = scmp.lt.s32.totalorder %s27, 0
        %s500 = scalar_select %p499, %s27, 0
        %s501 = sadd.s32 %s500, %s498
        %s502 = smul.addr %s501, 4
        %s503 = scalar_lea.vmem %s5, %s502
      $region64: #{uncertainty_estimator_forward.1} parent=55 // pred_fallthru
        _
    $region56: #{uncertainty_estimator_forward.1} parent=5 // pred_fallthru
      _
  $region6: #{uncertainty_estimator_forward.1} parent=0 // loop_footer
    %s17 = sadd.s32 1, %s13
  $region7: #{uncertainty_estimator_forward.1} parent=0 // loop_footer_branch
    %12 = sbr.rel target = $region3
  $region8: #{uncertainty_estimator_forward.1} parent=0 // loop_exit
    _

</llo_original>
